<compile_context>
chip_gen: v6e
topology: v6e:2x2x1
jax: 0.10.0
libtpu: 0.0.40
codegen_flags: <defaults>
</compile_context>

<pallas_src>
import functools

import jax
import jax.numpy as jnp
from jax.experimental import pallas as pl
from jax.experimental.pallas import tpu as pltpu


def _round_up(x: int, m: int) -> int:
    return ((x + m - 1) // m) * m


def _divisors_128(padded: int):
    """All 128-multiple divisors of `padded` (padded is a multiple of 128)."""
    m = padded // 128
    return [128 * d for d in range(1, m + 1) if m % d == 0]


def _vmem_bytes(B: int, tk: int, tn: int) -> int:
    """Approximate VMEM footprint of one grid step (double-buffered pipeline)."""
    x_tile = B * tk * 2          # bf16
    w_tile = tk * tn * 2         # bf16
    p_tile = 2 * tn * 4          # gamma + beta, f32
    out_tile = B * tn * 4        # f32 output block (resident accumulator)
    return 2 * (x_tile + w_tile + p_tile) + 2 * out_tile


def linear_bn_lrelu_kernel(x_ref, w_ref, g_ref, beta_ref, o_ref,
                           *, alpha: float, eps: float, inv_n: float):
    k = pl.program_id(1)

    @pl.when(k == 0)
    def _():
        o_ref[...] = jnp.zeros_like(o_ref)

    # MXU matmul: bf16 operands, f32 accumulation directly into the resident
    # output block (no extra scratch accumulator).
    o_ref[...] += jnp.dot(x_ref[...], w_ref[...],
                          preferred_element_type=jnp.float32)

    @pl.when(k == pl.num_programs(1) - 1)
    def _():
        out = o_ref[...]                                     # (B, TN) f32
        # One-pass batch statistics (per feature).  NOTE: E[x^2]-E[x]^2 is less
        # stable than PyTorch's two-pass variance; f32 accumulation + the
        # max(.,0) guard keep it within ~1e-4 for typical activations.
        mean = jnp.sum(out, axis=0, keepdims=True) * inv_n
        msq = jnp.sum(out * out, axis=0, keepdims=True) * inv_n
        var = jnp.maximum(msq - mean * mean, 0.0)
        # Fused BN affine: y = out * scale + shift.  (Linear bias omitted: it
        # cancels exactly under training-mode BN.)
        scale = g_ref[...] * jax.lax.rsqrt(var + eps)
        shift = beta_ref[...] - mean * scale
        y = out * scale + shift
        # LeakyReLU(alpha), valid for 0 < alpha < 1.
        o_ref[...] = jnp.maximum(y, alpha * y)


def make_linear_bn_lrelu(weight, bias, gamma, beta, *,
                         alpha_relu: float = 0.15, eps: float = 1e-5,
                         max_tk: int = 2048, max_tn: int = 512,
                         vmem_budget_bytes: int = 32 << 20,
                         prefer_megacore_split: bool = True):
    """One-time parameter prep (transpose + 128-padding + bf16 cast) and forward builder.

    weight: (out_features, in_features)  (PyTorch nn.Linear layout)
    bias / gamma / beta: (out_features,)
    Returns forward(x) with x: (B, in_features) -> (B, out_features) f32.
    """
    del bias  # cancels exactly under training-mode BatchNorm1d (norm_before=True)

    O, I = weight.shape
    i_pad = _round_up(I, 128)
    o_pad = _round_up(O, 128)

    # --- one-time parameter preparation (NOT per forward call) ---
    w_t = jnp.transpose(weight).astype(jnp.bfloat16)                 # (I, O) bf16
    w_t = jnp.pad(w_t, ((0, i_pad - I), (0, o_pad - O)))             # (I_pad, O_pad)
    g2 = jnp.pad(gamma.astype(jnp.float32), (0, o_pad - O),
                 constant_values=1.0).reshape(1, o_pad)
    be2 = jnp.pad(beta.astype(jnp.float32), (0, o_pad - O)).reshape(1, o_pad)

    tk_opts = _divisors_128(i_pad)
    tn_opts = _divisors_128(o_pad)

    def _select_tiles(B: int):
        tk = max([t for t in tk_opts if t <= max_tk] or [tk_opts[0]])
        tn = max([t for t in tn_opts if t <= max_tn] or [tn_opts[0]])
        # v7x megacore: if O fits in a single tile but the problem is large,
        # split TN so the "parallel" O axis has >= 2 tiles (no effect v5e/v6e).
        if (prefer_megacore_split and tn == o_pad and o_pad >= 256
                and B * i_pad >= (1 << 21)):
            smaller = [t for t in tn_opts if t < o_pad]
            if smaller:
                tn = max(smaller)
        # Fit the double-buffered footprint into the VMEM budget.  Shrink tk
        # first (cheap: only more K steps), tn last (multiplies x re-streaming).
        while _vmem_bytes(B, tk, tn) > vmem_budget_bytes:
            smaller_tk = [t for t in tk_opts if t < tk]
            smaller_tn = [t for t in tn_opts if t < tn]
            if smaller_tk:
                tk = max(smaller_tk)
            elif smaller_tn:
                tn = max(smaller_tn)
            else:
                break
        return tk, tn

    def forward(x):
        B, Ix = x.shape
        assert Ix == I, f"expected in_features={I}, got {Ix}"

        x_bf = x.astype(jnp.bfloat16)
        x_in = x_bf if i_pad == I else jnp.pad(x_bf, ((0, 0), (0, i_pad - I)))

        tk, tn = _select_tiles(B)
        n_o = o_pad // tn
        n_k = i_pad // tk
        vmem_limit = _vmem_bytes(B, tk, tn) + (8 << 20)   # + compiler scratch headroom

        kernel = functools.partial(linear_bn_lrelu_kernel,
                                   alpha=alpha_relu, eps=eps, inv_n=1.0 / B)

        out = pl.pallas_call(
            kernel,
            out_shape=jax.ShapeDtypeStruct((B, o_pad), jnp.float32),
            grid_spec=pltpu.PrefetchScalarGridSpec(
                num_scalar_prefetch=0,
                grid=(n_o, n_k),                       # O parallel, K reduction (last)
                in_specs=[
                    pl.BlockSpec((B, tk), lambda j, k: (0, k)),     # x  (bf16)
                    pl.BlockSpec((tk, tn), lambda j, k: (k, j)),    # W^T (bf16)
                    pl.BlockSpec((1, tn), lambda j, k: (0, j)),     # gamma
                    pl.BlockSpec((1, tn), lambda j, k: (0, j)),     # beta
                ],
                out_specs=pl.BlockSpec((B, tn), lambda j, k: (0, j)),
            ),
            compiler_params=pltpu.CompilerParams(
                dimension_semantics=("parallel", "arbitrary"),
                vmem_limit_bytes=int(vmem_limit)),
        )(x_in, w_t, g2, be2)

        return out[:, :O] if o_pad != O else out

    return forward


if __name__ == "__main__":
    B, IN_F, OUT_F = 8, 32, 32

    key = jax.random.PRNGKey(0)
    kx, kw, kb = jax.random.split(key, 3)

    x = jax.random.normal(kx, (B, IN_F), dtype=jnp.float32)

    # Deterministic parameter init (mimic PyTorch uniform bound = 1/sqrt(in_features))
    bound = 1.0 / (IN_F ** 0.5)
    weight = jax.random.uniform(kw, (OUT_F, IN_F), minval=-bound, maxval=bound,
                                dtype=jnp.float32)
    bias = jax.random.uniform(kb, (OUT_F,), minval=-bound, maxval=bound,
                              dtype=jnp.float32)
    gamma = jnp.ones((OUT_F,), dtype=jnp.float32)   # BatchNorm1d affine init
    beta = jnp.zeros((OUT_F,), dtype=jnp.float32)

    forward = make_linear_bn_lrelu(weight, bias, gamma, beta,
                                   alpha_relu=0.15, eps=1e-5)
    out = jax.block_until_ready(forward(x))

    # Reference 1: bf16-operand matmul (same precision as the kernel), with the
    # bias included to verify it indeed cancels under training-mode BN.
    lin_bf = jnp.dot(x.astype(jnp.bfloat16), weight.T.astype(jnp.bfloat16),
                     preferred_element_type=jnp.float32) + bias
    mean = lin_bf.mean(axis=0, keepdims=True)
    var = ((lin_bf - mean) ** 2).mean(axis=0, keepdims=True)
    bn = (lin_bf - mean) / jnp.sqrt(var + 1e-5) * gamma + beta
    ref_bf = jnp.where(bn >= 0, bn, 0.15 * bn)

    # Reference 2: full-f32 PyTorch-semantics reference (loose tolerance: bf16 operands).
    lin_f32 = x @ weight.T + bias
    mean32 = lin_f32.mean(axis=0, keepdims=True)
    var32 = ((lin_f32 - mean32) ** 2).mean(axis=0, keepdims=True)
    bn32 = (lin_f32 - mean32) / jnp.sqrt(var32 + 1e-5) * gamma + beta
    ref_f32 = jnp.where(bn32 >= 0, bn32, 0.15 * bn32)

    assert out.shape == ref_bf.shape, (out.shape, ref_bf.shape)
    assert jnp.allclose(out, ref_bf, atol=2e-3, rtol=2e-3), "mismatch vs bf16 reference"
    assert jnp.allclose(out, ref_f32, atol=5e-2, rtol=5e-2), "mismatch vs f32 reference"

    print("KERNEL_OK")
</pallas_src>

<mosaic_0001>
module attributes {stable_mosaic.version = 11 : i64} {
  func.func @linear_bn_lrelu_kernel(%arg0: i32, %arg1: i32, %arg2: memref<8x128xbf16, #tpu.memory_space<vmem>>, %arg3: memref<128x128xbf16, #tpu.memory_space<vmem>>, %arg4: memref<1x128xf32, #tpu.memory_space<vmem>>, %arg5: memref<1x128xf32, #tpu.memory_space<vmem>>, %arg6: memref<8x128xf32, #tpu.memory_space<vmem>>) attributes {dimension_semantics = [#tpu.dimension_semantics<parallel>, #tpu.dimension_semantics<arbitrary>], iteration_bounds = array<i64: 1, 1>, scalar_prefetch = 0 : i64, scratch_operands = 0 : i64, tpu.core_type = #tpu.core_type<tc>, window_params = [{transform_indices = @transform_0, window_bounds = array<i64: 8, 128>}, {transform_indices = @transform_1, window_bounds = array<i64: 128, 128>}, {transform_indices = @transform_2, window_bounds = array<i64: 1, 128>}, {transform_indices = @transform_3, window_bounds = array<i64: 1, 128>}, {transform_indices = @transform_4, window_bounds = array<i64: 8, 128>}]} {
    %c0_i32 = arith.constant 0 : i32
    %0 = arith.cmpi eq, %arg1, %c0_i32 : i32
    %1 = arith.extui %0 : i1 to i32
    %c0_i32_0 = arith.constant 0 : i32
    %2 = arith.cmpi ne, %1, %c0_i32_0 : i32
    scf.if %2 {
      %cst_10 = arith.constant 0.000000e+00 : f32
      %12 = vector.broadcast %cst_10 : f32 to vector<8x128xf32>
      %c0_11 = arith.constant 0 : index
      %c0_12 = arith.constant 0 : index
      %13 = vector.load %arg6[%c0_11, %c0_12] : memref<8x128xf32, #tpu.memory_space<vmem>>, vector<8x128xf32>
      tpu.vector_store %arg6[%c0_11, %c0_12], %12 {strides = array<i32>} : memref<8x128xf32, #tpu.memory_space<vmem>>, vector<8x128xf32>,
    } else {
    }
    %c0 = arith.constant 0 : index
    %c0_1 = arith.constant 0 : index
    %3 = vector.load %arg6[%c0, %c0_1] : memref<8x128xf32, #tpu.memory_space<vmem>>, vector<8x128xf32>
    %c0_2 = arith.constant 0 : index
    %c0_3 = arith.constant 0 : index
    %4 = vector.load %arg2[%c0_2, %c0_3] : memref<8x128xbf16, #tpu.memory_space<vmem>>, vector<8x128xbf16>
    %c0_4 = arith.constant 0 : index
    %c0_5 = arith.constant 0 : index
    %5 = vector.load %arg3[%c0_4, %c0_5] : memref<128x128xbf16, #tpu.memory_space<vmem>>, vector<128x128xbf16>
    %cst = arith.constant dense<0.000000e+00> : vector<8x128xf32>
    %6 = tpu.matmul %4, %5, %cst {dimension_numbers = #tpu.dot_dimension_numbers<[1], [0], [0], [1], [0, 0, 1, 1], [], []>} : vector<8x128xbf16>, vector<128x128xbf16>, vector<8x128xf32> -> vector<8x128xf32>
    %7 = arith.addf %3, %6 : vector<8x128xf32>
    %c0_6 = arith.constant 0 : index
    %c0_7 = arith.constant 0 : index
    %8 = vector.load %arg6[%c0_6, %c0_7] : memref<8x128xf32, #tpu.memory_space<vmem>>, vector<8x128xf32>
    tpu.vector_store %arg6[%c0_6, %c0_7], %7 {strides = array<i32>} : memref<8x128xf32, #tpu.memory_space<vmem>>, vector<8x128xf32>,
    %c0_i32_8 = arith.constant 0 : i32
    %9 = arith.cmpi eq, %arg1, %c0_i32_8 : i32
    %10 = arith.extui %9 : i1 to i32
    %c0_i32_9 = arith.constant 0 : i32
    %11 = arith.cmpi ne, %10, %c0_i32_9 : i32
    scf.if %11 {
      %c0_10 = arith.constant 0 : index
      %c0_11 = arith.constant 0 : index
      %12 = vector.load %arg6[%c0_10, %c0_11] : memref<8x128xf32, #tpu.memory_space<vmem>>, vector<8x128xf32>
      %cst_12 = arith.constant dense<0.000000e+00> : vector<128xf32>
      %13 = vector.multi_reduction <add>, %12, %cst_12 [0] : vector<8x128xf32> to vector<128xf32>
      %14 = vector.shape_cast %13 : vector<128xf32> to vector<1x128xf32>
      %cst_13 = arith.constant 1.250000e-01 : f32
      %15 = vector.broadcast %cst_13 : f32 to vector<1x128xf32>
      %16 = arith.mulf %14, %15 : vector<1x128xf32>
      %17 = arith.mulf %12, %12 : vector<8x128xf32>
      %cst_14 = arith.constant dense<0.000000e+00> : vector<128xf32>
      %18 = vector.multi_reduction <add>, %17, %cst_14 [0] : vector<8x128xf32> to vector<128xf32>
      %19 = vector.shape_cast %18 : vector<128xf32> to vector<1x128xf32>
      %cst_15 = arith.constant 1.250000e-01 : f32
      %20 = vector.broadcast %cst_15 : f32 to vector<1x128xf32>
      %21 = arith.mulf %19, %20 : vector<1x128xf32>
      %22 = arith.mulf %16, %16 : vector<1x128xf32>
      %23 = arith.subf %21, %22 : vector<1x128xf32>
      %cst_16 = arith.constant 0.000000e+00 : f32
      %24 = vector.broadcast %cst_16 : f32 to vector<1x128xf32>
      %25 = arith.maximumf %23, %24 : vector<1x128xf32>
      %c0_17 = arith.constant 0 : index
      %c0_18 = arith.constant 0 : index
      %26 = vector.load %arg4[%c0_17, %c0_18] : memref<1x128xf32, #tpu.memory_space<vmem>>, vector<1x128xf32>
      %cst_19 = arith.constant 9.99999974E-6 : f32
      %27 = vector.broadcast %cst_19 : f32 to vector<1x128xf32>
      %28 = arith.addf %25, %27 : vector<1x128xf32>
      %29 = math.rsqrt %28 : vector<1x128xf32>
      %30 = arith.mulf %26, %29 : vector<1x128xf32>
      %c0_20 = arith.constant 0 : index
      %c0_21 = arith.constant 0 : index
      %31 = vector.load %arg5[%c0_20, %c0_21] : memref<1x128xf32, #tpu.memory_space<vmem>>, vector<1x128xf32>
      %32 = arith.mulf %16, %30 : vector<1x128xf32>
      %33 = arith.subf %31, %32 : vector<1x128xf32>
      %34 = vector.broadcast %30 : vector<1x128xf32> to vector<8x128xf32>
      %35 = arith.mulf %12, %34 : vector<8x128xf32>
      %36 = vector.broadcast %33 : vector<1x128xf32> to vector<8x128xf32>
      %37 = arith.addf %35, %36 : vector<8x128xf32>
      %cst_22 = arith.constant 1.500000e-01 : f32
      %38 = vector.broadcast %cst_22 : f32 to vector<8x128xf32>
      %39 = arith.mulf %38, %37 : vector<8x128xf32>
      %40 = arith.maximumf %37, %39 : vector<8x128xf32>
      %c0_23 = arith.constant 0 : index
      %c0_24 = arith.constant 0 : index
      %41 = vector.load %arg6[%c0_23, %c0_24] : memref<8x128xf32, #tpu.memory_space<vmem>>, vector<8x128xf32>
      tpu.vector_store %arg6[%c0_23, %c0_24], %40 {strides = array<i32>} : memref<8x128xf32, #tpu.memory_space<vmem>>, vector<8x128xf32>,
    } else {
    }
    return
  }
  func.func @transform_0(%arg0: i32, %arg1: i32) -> (i32, i32) {
    %c0_i32 = arith.constant 0 : i32
    %c0_i32_0 = arith.constant 0 : i32
    return %c0_i32, %arg1 : i32, i32
  }
  func.func @transform_1(%arg0: i32, %arg1: i32) -> (i32, i32) {
    %c0_i32 = arith.constant 0 : i32
    return %arg1, %arg0 : i32, i32
  }
  func.func @transform_2(%arg0: i32, %arg1: i32) -> (i32, i32) {
    %c0_i32 = arith.constant 0 : i32
    %c0_i32_0 = arith.constant 0 : i32
    return %c0_i32, %arg0 : i32, i32
  }
  func.func @transform_3(%arg0: i32, %arg1: i32) -> (i32, i32) {
    %c0_i32 = arith.constant 0 : i32
    %c0_i32_0 = arith.constant 0 : i32
    return %c0_i32, %arg0 : i32, i32
  }
  func.func @transform_4(%arg0: i32, %arg1: i32) -> (i32, i32) {
    %c0_i32 = arith.constant 0 : i32
    %c0_i32_0 = arith.constant 0 : i32
    return %c0_i32, %arg0 : i32, i32
  }
}

</mosaic_0001>

<llo_original>
// kernel: tpu_custom_call.1
$region0: #{tpu_custom_call.1}
  #allocation0 [shape = 'u32[]', space=smem, size = 0x4, offset = 0x4, fixed_abs, tag = 'smem constant byte address 0x4 - core index']
  #allocation1 [shape = 'u32[144,128]{1,0:T(1,128)}', space=vmem, size = 0x12000, scoped, tag = 'internal scratch']
  %s0 = inlined_call_operand.hbm [shape: bf16[8,128], index: 0, kind: input, shape index: {}]
  %s1 = inlined_call_operand.hbm [shape: bf16[128,128], index: 1, kind: input, shape index: {}]
  %s2 = inlined_call_operand.vmem [shape: f32[1,128], index: 2, kind: input, shape index: {}]
  %s3 = inlined_call_operand.vmem [shape: f32[1,128], index: 3, kind: input, shape index: {}]
  %s4 = inlined_call_operand.hbm [shape: f32[8,128], index: 4, kind: output, shape index: {}]
  %s5 = sld [smem:[#allocation0]]
  $region42: #{tpu_custom_call.1} parent=0
    _
  %s7 = ssub.s32 1, %s5
  %s8 = scalar_select 0, %s7, %s5
  $region1: #{tpu_custom_call.1} parent=0
    #allocation2 [shape = 'u8[2048]{0}', space=vmem, size = 0x800, scoped, tag = 'input window, operand 0, single buffered']
    #allocation3 [shape = 's32[1]{0}', space=sflag, size = 0x4, scoped, tag = 'scoped memory for tpu_custom_call.1']
    #allocation4 [shape = 's32[1]{0}', space=sflag, size = 0x4, scoped, tag = 'scoped memory for tpu_custom_call.1']
    #allocation5 [shape = 'u8[32768]{0}', space=vmem, size = 0x8000, scoped, tag = 'input window, operand 1, single buffered']
    #allocation6 [shape = 's32[1]{0}', space=sflag, size = 0x4, scoped, tag = 'scoped memory for tpu_custom_call.1']
    #allocation7 [shape = 'u8[4096]{0}', space=vmem, size = 0x1000, scoped, tag = 'output window, operand 0, single buffered']
    %9 = vsyncpa [#allocation3], 0
    %10 = vsyncpa [#allocation6], 0
    %11 = vsyncpa [#allocation4], 0
    // Predicated region
    $region2: #{tpu_custom_call.1} parent=1 // pred_check
      _
    $region3: #{tpu_custom_call.1} parent=1 // pred_check_branch
      %13 = sbr.rel (0) target = $region5
    $region4: #{tpu_custom_call.1} parent=1 // pred_region
      %s15 = ssub.s32 64, 64
      %16 = vsyncadd [#allocation3], %s15
      %s18 = sshll.u32 [#allocation2], 4
      %s19 = int_to_ptr.vmem [resolvable:$true] %s18
      %21 = dma.hbm_to_vmem [thread:$0]  %s0, 64, %s19, [#allocation3]
    $region5: #{tpu_custom_call.1} parent=1 // pred_fallthru
      _
    // Predicated region
    $region6: #{tpu_custom_call.1} parent=1 // pred_check
      _
    $region7: #{tpu_custom_call.1} parent=1 // pred_check_branch
      %23 = sbr.rel (0) target = $region9
    $region8: #{tpu_custom_call.1} parent=1 // pred_region
      %s25 = ssub.s32 1024, 1024
      %26 = vsyncadd [#allocation6], %s25
      %s27 = sshll.u32 [#allocation5], 4
      %s28 = int_to_ptr.vmem [resolvable:$true] %s27
      %33 = dma.hbm_to_vmem [thread:$0]  %s1, 1024, %s28, [#allocation6], 64, 64, 4
    $region9: #{tpu_custom_call.1} parent=1 // pred_fallthru
      _
    // Predicated region
    $region10: #{tpu_custom_call.1} parent=1 // pred_check
      _
    $region11: #{tpu_custom_call.1} parent=1 // pred_check_branch
      %35 = sbr.rel (0) target = $region13
    $region12: #{tpu_custom_call.1} parent=1 // pred_region
      _
    $region13: #{tpu_custom_call.1} parent=1 // pred_fallthru
      _
    // Predicated region
    $region14: #{tpu_custom_call.1} parent=1 // pred_check
      _
    $region15: #{tpu_custom_call.1} parent=1 // pred_check_branch
      %37 = sbr.rel (0) target = $region17
    $region16: #{tpu_custom_call.1} parent=1 // pred_region
      _
    $region17: #{tpu_custom_call.1} parent=1 // pred_fallthru
      _
    // Predicated region
    $region18: #{tpu_custom_call.1} parent=1 // pred_check
      _
    $region19: #{tpu_custom_call.1} parent=1 // pred_check_branch
      %39 = sbr.rel (0) target = $region21
    $region20: #{tpu_custom_call.1} parent=1 // pred_region
      %40 = dma.done [#allocation3], 64
    $region21: #{tpu_custom_call.1} parent=1 // pred_fallthru
      _
    // Predicated region
    $region22: #{tpu_custom_call.1} parent=1 // pred_check
      _
    $region23: #{tpu_custom_call.1} parent=1 // pred_check_branch
      %42 = sbr.rel (0) target = $region25
    $region24: #{tpu_custom_call.1} parent=1 // pred_region
      %43 = dma.done [#allocation6], 1024
    $region25: #{tpu_custom_call.1} parent=1 // pred_fallthru
      _
    %p45 = scmp.eq.s32.totalorder 0, 0
    // Predicated region
    $region26: #{tpu_custom_call.1} parent=1 // pred_check
      %p46 = pneg %p45
    $region27: #{tpu_custom_call.1} parent=1 // pred_check_branch
      %48 = sbr.rel (%p46) target = $region29
    $region28: #{tpu_custom_call.1} parent=1 // pred_region
      %49 = vst [vmem:[#allocation7] sm:$0xff] 0.0
    $region29: #{tpu_custom_call.1} parent=1 // pred_fallthru
      _
    %v50 = vld [vmem:[#allocation7] sm:$0xff]
    %v51 = vld [vmem:[#allocation2] sm:$0xf]
    %v52 = vld [vmem:[#allocation5] sm:$0xf]
    %v53 = vld [vmem:[#allocation5 + $0x4] sm:$0xf]
    %v54 = vld [vmem:[#allocation5 + $0x8] sm:$0xf]
    %v55 = vld [vmem:[#allocation5 + $0xc] sm:$0xf]
    %v56 = vld [vmem:[#allocation5 + $0x10] sm:$0xf]
    %v57 = vld [vmem:[#allocation5 + $0x14] sm:$0xf]
    %v58 = vld [vmem:[#allocation5 + $0x18] sm:$0xf]
    %v59 = vld [vmem:[#allocation5 + $0x1c] sm:$0xf]
    %v60 = vld [vmem:[#allocation5 + $0x20] sm:$0xf]
    %v61 = vld [vmem:[#allocation5 + $0x24] sm:$0xf]
    %v62 = vld [vmem:[#allocation5 + $0x28] sm:$0xf]
    %v63 = vld [vmem:[#allocation5 + $0x2c] sm:$0xf]
    %v64 = vld [vmem:[#allocation5 + $0x30] sm:$0xf]
    %v65 = vld [vmem:[#allocation5 + $0x34] sm:$0xf]
    %v66 = vld [vmem:[#allocation5 + $0x38] sm:$0xf]
    %v67 = vld [vmem:[#allocation5 + $0x3c] sm:$0xf]
    %v84 = vunpack.c.l.b16 %v52
    %v85 = vunpack.c.l.b16 %v53
    %v86 = vunpack.c.l.b16 %v54
    %v87 = vunpack.c.l.b16 %v55
    %v88 = vunpack.c.l.b16 %v56
    %v89 = vunpack.c.l.b16 %v57
    %v90 = vunpack.c.l.b16 %v58
    %v91 = vunpack.c.l.b16 %v59
    %v92 = vunpack.c.l.b16 %v60
    %v93 = vunpack.c.l.b16 %v61
    %v94 = vunpack.c.l.b16 %v62
    %v95 = vunpack.c.l.b16 %v63
    %v96 = vunpack.c.l.b16 %v64
    %v97 = vunpack.c.l.b16 %v65
    %v98 = vunpack.c.l.b16 %v66
    %v99 = vunpack.c.l.b16 %v67
    %v100 = vpack.c.b16 %v85, %v84
    %v101 = vpack.c.b16 %v87, %v86
    %v102 = vpack.c.b16 %v89, %v88
    %v103 = vpack.c.b16 %v91, %v90
    %v104 = vpack.c.b16 %v93, %v92
    %v105 = vpack.c.b16 %v95, %v94
    %v106 = vpack.c.b16 %v97, %v96
    %v107 = vpack.c.b16 %v99, %v98
    %116 = vmatprep.subr.bf16.mxu0 0
    %117 = vmatpush1.bf16.msra.mxu0 %v107
    %118 = vmatprep.subr.bf16.mxu0 0
    %119 = vmatpush1.bf16.msra.mxu0 %v106
    %120 = vmatprep.subr.bf16.mxu0 0
    %121 = vmatpush1.bf16.msra.mxu0 %v105
    %122 = vmatprep.subr.bf16.mxu0 0
    %123 = vmatpush1.bf16.msra.mxu0 %v104
    %124 = vmatprep.subr.bf16.mxu0 0
    %125 = vmatpush1.bf16.msra.mxu0 %v103
    %126 = vmatprep.subr.bf16.mxu0 0
    %127 = vmatpush1.bf16.msra.mxu0 %v102
    %128 = vmatprep.subr.bf16.mxu0 0
    %129 = vmatpush1.bf16.msra.mxu0 %v101
    %130 = vmatprep.subr.bf16.mxu0 0
    %131 = vmatpush1.bf16.msra.mxu0 %v100
    %132 = vmatprep.subr.bf16.mxu0 0
    %133 = vmatpush2.bf16.msra.mxu0 0
    %134 = vmatprep.subr.bf16.mxu0 0
    %135 = vmatpush2.bf16.msra.mxu0 0
    %136 = vmatprep.subr.bf16.mxu0 0
    %137 = vmatpush2.bf16.msra.mxu0 0
    %138 = vmatprep.subr.bf16.mxu0 0
    %139 = vmatpush2.bf16.msra.mxu0 0
    %140 = vmatprep.subr.bf16.mxu0 0
    %141 = vmatpush2.bf16.msra.mxu0 0
    %142 = vmatprep.subr.bf16.mxu0 0
    %143 = vmatpush2.bf16.msra.mxu0 0
    %144 = vmatprep.subr.bf16.mxu0 0
    %145 = vmatpush2.bf16.msra.mxu0 0
    %146 = vmatprep.subr.bf16.mxu0 0
    %147 = vmatpush2.bf16.msra.mxu0 0
    %148 = vmatprep.mubr.bf16.mxu0 0
    %149 = vmatmul.mubr.bf16.gmra.mxu0 %v51
    %v150 = vpop.f32.mrf.mxu0
    %v151 = vadd.f32 0.0, %v150
    %v152 = vpop.f32.mrf.mxu0
    %v153 = vpop.f32.mrf.mxu0
    %v154 = vpop.f32.mrf.mxu0
    %155 = vdwg.mxu0
    %v156 = vadd.f32 %v50, %v151
    %157 = vst [vmem:[#allocation7] sm:$0xff] %v156
    // Predicated region
    $region30: #{tpu_custom_call.1} parent=1 // pred_check
      %p158 = pneg %p45
    $region31: #{tpu_custom_call.1} parent=1 // pred_check_branch
      %160 = sbr.rel (%p158) target = $region33
    $region32: #{tpu_custom_call.1} parent=1 // pred_region
      %v161 = vld [vmem:[#allocation7] sm:$0xff]
      %v162 = vrot.slane %v161, 4
      %v163 = vadd.f32 %v161, %v162
      %v164 = vrot.slane %v163, 2
      %v165 = vadd.f32 %v163, %v164
      %v166 = vrot.slane %v165, 1
      %v167 = vadd.f32 %v165, %v166
      %v168 = vmul.f32 %v167, 0.125
      %v169 = vmul.f32 %v161, %v161
      %v170 = vrot.slane %v169, 4
      %v171 = vadd.f32 %v169, %v170
      %v172 = vrot.slane %v171, 2
      %v173 = vadd.f32 %v171, %v172
      %v174 = vrot.slane %v173, 1
      %v175 = vadd.f32 %v173, %v174
      %v176 = vmul.f32 %v175, 0.125
      %v177 = vmul.f32 %v168, %v168
      %v178 = vsub.f32 %v176, %v177
      %v179 = vmax.f32 %v178, 0.0
      %v180 = vld [vmem:[%s2] sm:$0x1]
      %v181 = vadd.f32 %v179, 1e-05
      %v182 = vrsqrt.pop %v181
      %v183 = vmul.f32 %v180, %v182
      %v184 = vld [vmem:[%s3] sm:$0x1]
      %v185 = vmul.f32 %v168, %v183
      %v186 = vsub.f32 %v184, %v185
      %v188 = vlaneseq
      %v189 = vshrl.u32 %v188, 7
      %v190 = vsub.s32 0, %v189
      %v191 = vrot.slane %v183, %v190
      %v193 = vmul.f32 %v161, %v191
      %v195 = vlaneseq
      %v196 = vshrl.u32 %v195, 7
      %v197 = vsub.s32 0, %v196
      %v198 = vrot.slane %v186, %v197
      %v200 = vadd.f32 %v193, %v198
      %v201 = vmul.f32 %v200, 0.15
      %v202 = vmax.f32 %v200, %v201
      %203 = vst [vmem:[#allocation7] sm:$0xff] %v202
    $region33: #{tpu_custom_call.1} parent=1 // pred_fallthru
      _
    // Predicated region
    $region34: #{tpu_custom_call.1} parent=1 // pred_check
      _
    $region35: #{tpu_custom_call.1} parent=1 // pred_check_branch
      %205 = sbr.rel (0) target = $region37
    $region36: #{tpu_custom_call.1} parent=1 // pred_region
      %s207 = ssub.s32 128, 128
      %208 = vsyncadd [#allocation4], %s207
      %s210 = sshll.u32 [#allocation7], 4
      %s211 = int_to_ptr.vmem [resolvable:$true] %s210
      %213 = dma.vmem_to_hbm [thread:$0]  %s211, 128, %s4, [#allocation4]
    $region37: #{tpu_custom_call.1} parent=1 // pred_fallthru
      _
    // Predicated region
    $region38: #{tpu_custom_call.1} parent=1 // pred_check
      _
    $region39: #{tpu_custom_call.1} parent=1 // pred_check_branch
      %215 = sbr.rel (0) target = $region41
    $region40: #{tpu_custom_call.1} parent=1 // pred_region
      %216 = dma.done [#allocation4], 128
    $region41: #{tpu_custom_call.1} parent=1 // pred_fallthru
      _
    %217 = vsyncpa [#allocation3], 1
    %218 = vsyncpa [#allocation6], 1
    %219 = vsyncpa [#allocation4], 1

</llo_original>
